<compile_context>
chip_gen: v6e
topology: v6e:2x2x1
jax: 0.10.0
libtpu: 0.0.40
codegen_flags: <defaults>
</compile_context>

<pallas_src>
import functools
import math

import jax
import jax.numpy as jnp
from jax.experimental import pallas as pl
from jax.experimental.pallas import tpu as pltpu


def make_positional_encoding(d_model: int, max_len: int = 5000,
                             dtype=jnp.float32) -> jnp.ndarray:
    """Same math as the PyTorch __init__, stored dense as (max_len, d_model)."""
    assert d_model % 2 == 0, "d_model must be even (same constraint as the PyTorch code)"
    position = jnp.arange(max_len, dtype=jnp.float32)[:, None]            # (max_len, 1)
    div_term = jnp.exp(
        jnp.arange(0, d_model, 2, dtype=jnp.float32) * (-math.log(10000.0) / d_model)
    )                                                                      # (d_model/2,)
    pe = jnp.zeros((max_len, d_model), dtype=jnp.float32)
    pe = pe.at[:, 0::2].set(jnp.sin(position * div_term))
    pe = pe.at[:, 1::2].set(jnp.cos(position * div_term))
    return pe.astype(dtype)                                                # (max_len, d_model)


def _pe_add_kernel(x_ref, pe_ref, o_ref, *, batch: int, d_model: int):
    # x_ref/o_ref: (tS, B*D) lane-dense tiles; pe_ref: (tS, D) dense tile.
    pe = pe_ref[...]
    if batch == 1:
        o_ref[...] = (x_ref[...] + pe).astype(o_ref.dtype)
        return
    # Static unroll over the batch (batch is a shape, known at trace time).
    # Each step is a (tS, D) lane-slice add; the broadcast of pe across B costs
    # only VPU slots, which have slack in this memory-bound kernel.
    for b in range(batch):
        sl = slice(b * d_model, (b + 1) * d_model)
        o_ref[:, sl] = (x_ref[:, sl] + pe).astype(o_ref.dtype)


def _padded_tile_bytes(rows: int, cols: int, itemsize: int) -> int:
    """Real VMEM footprint of a (rows, cols) tile after (8,128) tiling/padding."""
    sublane = 8 * max(1, 4 // itemsize)          # 8 (f32), 16 (bf16), 32 (int8)
    r = ((rows + sublane - 1) // sublane) * sublane
    c = ((cols + 127) // 128) * 128
    return r * c * itemsize


def _vmem_capacity_bytes() -> int:
    # Generation-aware (v5e/v6e: 128 MiB, v7x: 64 MiB per TC); conservative fallback.
    try:
        return int(getattr(pltpu.get_tpu_info(), "vmem_capacity_bytes", 64 << 20))
    except Exception:
        return 64 << 20


def positional_encoding_forward(x: jnp.ndarray, pe: jnp.ndarray,
                                *, target_tile_bytes: int = 4 * 1024 * 1024,
                                donate_x: bool = False) -> jnp.ndarray:
    """x: (S, B, D); pe: (max_len, D) or (max_len, 1, D). Returns x + pe[:S] (broadcast over B)."""
    S, B, D = x.shape
    if pe.ndim == 3:                      # accept the PyTorch (max_len, 1, D) buffer shape
        pe = pe.reshape(pe.shape[0], pe.shape[2])
    max_len = pe.shape[0]
    assert pe.shape == (max_len, D), f"pe shape {pe.shape} incompatible with d_model={D}"
    assert S <= max_len, f"sequence length {S} exceeds max_len {max_len}"

    itemsize = x.dtype.itemsize
    pe_itemsize = pe.dtype.itemsize
    vmem_cap = _vmem_capacity_bytes()
    budget = vmem_cap // 2                # resident tiles must stay under half of VMEM

    x2d = x.reshape(S, B * D)             # free: x is contiguous, (B, D) collapse

    if S < 8:
        # Tiny sequence: single block equal to the full arrays (always legal).
        # pe must be sliced so its block equals its full shape; the copy is S*D elems.
        tS = S
        pe_buf = pe[:S]
    else:
        # Tile the sequence axis. ~target_tile_bytes per x tile, multiple of 8 rows.
        row_bytes = B * D * itemsize
        tS = max(8, (target_tile_bytes // max(row_bytes, 1)) // 8 * 8)
        # Keep >= ~8 grid steps when the sequence is long enough (v7x 2-TC sharding
        # + BlockSpec double-buffer pipelining need multiple blocks per core).
        min_steps = 8
        if S >= min_steps * 8:
            tS = min(tS, max(8, (S // min_steps) // 8 * 8))
        # Never exceed S while staying a multiple of 8 (last block may be partial).
        tS = max(8, min(tS, S if S % 8 == 0 else (S // 8) * 8))
        pe_buf = pe                        # full buffer, windowed by the index_map

    # Real (padded) resident VMEM: 2x in + 2x out (double-buffered) + 2x pe + slack.
    def _resident(ts):
        xt = _padded_tile_bytes(ts, B * D, itemsize)
        pt = _padded_tile_bytes(ts, D, pe_itemsize)
        return 2 * xt + 2 * xt + 2 * pt + xt

    resident = _resident(tS)
    while resident > budget and tS > 8 and S >= 8:
        tS = max(8, (tS // 2) // 8 * 8)
        resident = _resident(tS)
    assert resident <= (vmem_cap * 3) // 4, f"VMEM budget exceeded: {resident} B of {vmem_cap} B"

    n_blocks = pl.cdiv(S, tS)
    vmem_limit = int(min((vmem_cap * 3) // 4, max(32 << 20, resident + (16 << 20))))

    cost = pl.CostEstimate(
        flops=S * B * D,
        transcendentals=0,
        bytes_accessed=2 * S * B * D * itemsize + S * D * pe_itemsize,
    )

    kernel = functools.partial(_pe_add_kernel, batch=B, d_model=D)

    out2d = pl.pallas_call(
        kernel,
        out_shape=jax.ShapeDtypeStruct((S, B * D), x.dtype),
        grid=(n_blocks,),
        in_specs=[
            pl.BlockSpec((tS, B * D), lambda i: (i, 0)),   # x: lane-dense (tS, B*D)
            pl.BlockSpec((tS, D), lambda i: (i, 0)),       # pe: dense (tS, D), no pe[:S] copy
        ],
        out_specs=pl.BlockSpec((tS, B * D), lambda i: (i, 0)),
        compiler_params=pltpu.CompilerParams(
            # Every grid step is independent: lets v7x shard the sequence axis
            # across its two TensorCores; neutral on v5e/v6e.
            dimension_semantics=("parallel",),
            vmem_limit_bytes=vmem_limit,
        ),
        cost_estimate=cost,
        input_output_aliases=({0: 0} if donate_x else {}),
    )(x2d, pe_buf)

    return out2d.reshape(S, B, D)


if __name__ == "__main__":
    # Small shapes consistent with the module: seq=8, batch=2, d_model=32.
    S, B, D = 8, 2, 32
    key = jax.random.PRNGKey(0)
    x = jax.random.normal(key, (S, B, D), dtype=jnp.float32)

    # Build pe directly in x.dtype (for bf16 inputs this halves pe HBM traffic).
    pe = make_positional_encoding(d_model=D, max_len=5000, dtype=x.dtype)   # (5000, 32)

    out = positional_encoding_forward(x, pe)
    out = jax.block_until_ready(out)

    # Reference check (plain JAX, same semantics as the PyTorch forward).
    ref = x + pe[:S][:, None, :]          # (S, 1, D) broadcasts over B
    assert out.shape == (S, B, D)
    assert jnp.allclose(out, ref, atol=1e-6), "mismatch vs reference"

    print("KERNEL_OK")
</pallas_src>

<mosaic_0001>
module attributes {stable_mosaic.version = 11 : i64} {
  func.func @_pe_add_kernel(%arg0: i32, %arg1: memref<8x64xf32, #tpu.memory_space<vmem>>, %arg2: memref<8x32xf32, #tpu.memory_space<vmem>>, %arg3: memref<8x64xf32, #tpu.memory_space<vmem>>) attributes {dimension_semantics = [#tpu.dimension_semantics<parallel>], iteration_bounds = array<i64: 1>, scalar_prefetch = 0 : i64, scratch_operands = 0 : i64, tpu.core_type = #tpu.core_type<tc>, window_params = [{transform_indices = @transform_0, window_bounds = array<i64: 8, 64>}, {transform_indices = @transform_1, window_bounds = array<i64: 8, 32>}, {transform_indices = @transform_2, window_bounds = array<i64: 8, 64>}]} {
    %c0 = arith.constant 0 : index
    %c0_0 = arith.constant 0 : index
    %0 = vector.load %arg2[%c0, %c0_0] : memref<8x32xf32, #tpu.memory_space<vmem>>, vector<8x32xf32>
    %c0_1 = arith.constant 0 : index
    %c0_2 = arith.constant 0 : index
    %1 = vector.load %arg1[%c0_1, %c0_2] : memref<8x64xf32, #tpu.memory_space<vmem>>, vector<8x32xf32>
    %2 = arith.addf %1, %0 : vector<8x32xf32>
    %c0_3 = arith.constant 0 : index
    %c0_4 = arith.constant 0 : index
    %3 = vector.load %arg3[%c0_3, %c0_4] : memref<8x64xf32, #tpu.memory_space<vmem>>, vector<8x32xf32>
    tpu.vector_store %arg3[%c0_3, %c0_4], %2 {strides = array<i32>} : memref<8x64xf32, #tpu.memory_space<vmem>>, vector<8x32xf32>,
    %c0_5 = arith.constant 0 : index
    %c32 = arith.constant 32 : index
    %4 = vector.load %arg1[%c0_5, %c32] : memref<8x64xf32, #tpu.memory_space<vmem>>, vector<8x32xf32>
    %5 = arith.addf %4, %0 : vector<8x32xf32>
    %c0_6 = arith.constant 0 : index
    %c32_7 = arith.constant 32 : index
    %6 = vector.load %arg3[%c0_6, %c32_7] : memref<8x64xf32, #tpu.memory_space<vmem>>, vector<8x32xf32>
    tpu.vector_store %arg3[%c0_6, %c32_7], %5 {strides = array<i32>} : memref<8x64xf32, #tpu.memory_space<vmem>>, vector<8x32xf32>,
    return
  }
  func.func @transform_0(%arg0: i32) -> (i32, i32) {
    %c0_i32 = arith.constant 0 : i32
    %c0_i32_0 = arith.constant 0 : i32
    return %arg0, %c0_i32 : i32, i32
  }
  func.func @transform_1(%arg0: i32) -> (i32, i32) {
    %c0_i32 = arith.constant 0 : i32
    %c0_i32_0 = arith.constant 0 : i32
    return %arg0, %c0_i32 : i32, i32
  }
  func.func @transform_2(%arg0: i32) -> (i32, i32) {
    %c0_i32 = arith.constant 0 : i32
    %c0_i32_0 = arith.constant 0 : i32
    return %arg0, %c0_i32 : i32, i32
  }
}

</mosaic_0001>

<llo_original>
// kernel: tpu_custom_call.1
$region0: #{tpu_custom_call.1}
  #allocation0 [shape = 'u32[]', space=smem, size = 0x4, offset = 0x4, fixed_abs, tag = 'smem constant byte address 0x4 - core index']
  #allocation1 [shape = 'u32[144,128]{1,0:T(1,128)}', space=vmem, size = 0x12000, scoped, tag = 'internal scratch']
  %s0 = inlined_call_operand.vmem [shape: f32[8,64], index: 0, kind: input, shape index: {}]
  %s1 = inlined_call_operand.vmem [shape: f32[5000,32], index: 1, kind: input, shape index: {}]
  %s2 = inlined_call_operand.hbm [shape: f32[8,64], index: 2, kind: output, shape index: {}]
  %s3 = sld [smem:[#allocation0]]
  $region18: #{tpu_custom_call.1} parent=0
    _
  %s5 = ssub.s32 1, %s3
  %s6 = scalar_select 0, %s5, %s3
  $region1: #{tpu_custom_call.1} parent=0
    #allocation2 [shape = 'u8[4096]{0}', space=vmem, size = 0x1000, scoped, tag = 'output window, operand 0, single buffered']
    #allocation3 [shape = 's32[1]{0}', space=sflag, size = 0x4, scoped, tag = 'scoped memory for tpu_custom_call.1']
    %7 = vsyncpa [#allocation3], 0
    // Predicated region
    $region2: #{tpu_custom_call.1} parent=1 // pred_check
      _
    $region3: #{tpu_custom_call.1} parent=1 // pred_check_branch
      %9 = sbr.rel (0) target = $region5
    $region4: #{tpu_custom_call.1} parent=1 // pred_region
      _
    $region5: #{tpu_custom_call.1} parent=1 // pred_fallthru
      _
    // Predicated region
    $region6: #{tpu_custom_call.1} parent=1 // pred_check
      _
    $region7: #{tpu_custom_call.1} parent=1 // pred_check_branch
      %11 = sbr.rel (0) target = $region9
    $region8: #{tpu_custom_call.1} parent=1 // pred_region
      _
    $region9: #{tpu_custom_call.1} parent=1 // pred_fallthru
      _
    %v12 = vld [vmem:[%s1] sm:$0xff]
    %v13 = vld [vmem:[%s0] sm:$0xff]
    %v14 = vadd.f32 %v13, %v12
    %vm15 = vcmask 261120
    %16 = vst.msk [vmem:[#allocation2] sm:$0xff] %vm15, %v14
    %v17 = vld [vmem:[%s0] sm:$0xff]
    %19 = vrot.lane.b32.xlu0 %v12, 32
    %v20 = vpop.permute.xlu0 %19
    %v22 = vadd.f32 %v17, %v20
    %vm23 = vcmask 523520
    %24 = vst.msk [vmem:[#allocation2] sm:$0xff] %vm23, %v22
    // Predicated region
    $region10: #{tpu_custom_call.1} parent=1 // pred_check
      _
    $region11: #{tpu_custom_call.1} parent=1 // pred_check_branch
      %26 = sbr.rel (0) target = $region13
    $region12: #{tpu_custom_call.1} parent=1 // pred_region
      %s28 = ssub.s32 128, 128
      %29 = vsyncadd [#allocation3], %s28
      %s31 = sshll.u32 [#allocation2], 4
      %s32 = int_to_ptr.vmem [resolvable:$true] %s31
      %34 = dma.vmem_to_hbm [thread:$0]  %s32, 128, %s2, [#allocation3]
    $region13: #{tpu_custom_call.1} parent=1 // pred_fallthru
      _
    // Predicated region
    $region14: #{tpu_custom_call.1} parent=1 // pred_check
      _
    $region15: #{tpu_custom_call.1} parent=1 // pred_check_branch
      %36 = sbr.rel (0) target = $region17
    $region16: #{tpu_custom_call.1} parent=1 // pred_region
      %37 = dma.done [#allocation3], 128
    $region17: #{tpu_custom_call.1} parent=1 // pred_fallthru
      _
    %38 = vsyncpa [#allocation3], 1

</llo_original>
